<compile_context>
chip_gen: v7x
topology: tpu7x:2x2x1
jax: 0.10.0
libtpu: 0.0.40
codegen_flags: <defaults>
</compile_context>

<pallas_src>
import math

import jax
import jax.numpy as jnp
from jax.experimental import pallas as pl
from jax.experimental.pallas import tpu as pltpu


def _cdiv(a: int, b: int) -> int:
    return -(-a // b)


def _get_pad(size: int, multiple: int):
    new_size = math.ceil(size / multiple) * multiple
    pad_size = new_size - size
    pad_left = pad_size // 2
    pad_right = pad_size - pad_left
    return pad_left, pad_right


def _padded_plane_bytes(rows: int, cols: int, dtype) -> int:
    """Bytes one (rows, cols) plane actually occupies in VMEM.

    Last two dims are laid out in (sublane, 128) tiles; sublane count is 8 for
    4-byte dtypes, 16 for 2-byte, 32 for 1-byte."""
    itemsize = jnp.dtype(dtype).itemsize
    sub = max(8, 32 // itemsize)
    prows = _cdiv(rows, sub) * sub
    pcols = _cdiv(cols, 128) * 128
    return prows * pcols * itemsize


def center_padding(x: jax.Array, multiple: int = 14, *,
                   allow_fallback: bool = True) -> jax.Array:
    """Pallas implementation of CenterPadding.forward for 4-D NCHW input."""
    assert x.ndim == 4, "expected NCHW input"
    N, C, H, W = x.shape
    pad_top, pad_bot = _get_pad(H, multiple)
    pad_lft, pad_rgt = _get_pad(W, multiple)
    Hp = H + pad_top + pad_bot
    Wp = W + pad_lft + pad_rgt

    if Hp == H and Wp == W:
        # Already aligned: F.pad with zero pads is a value-level no-op.
        return x

    # Generation-aware budgets (per block-pair, single buffer) and VMEM limit.
    vmem_phys = None
    try:
        vmem_phys = getattr(pltpu.get_tpu_info(), "vmem_capacity_bytes", None)
    except Exception:
        vmem_phys = None
    if vmem_phys is not None and vmem_phys > (100 << 20):   # v5e / v6e: 128 MiB
        budget_bytes, vmem_limit = 16 << 20, 64 << 20
    else:                                                   # v7x (64 MiB) / unknown
        budget_bytes, vmem_limit = 12 << 20, 48 << 20

    # Padded-layout footprint of one (H, W) input plane + one (Hp, Wp) output
    # plane (per leading-axis element, per pipeline buffer).
    pair_bytes = (_padded_plane_bytes(H, W, x.dtype)
                  + _padded_plane_bytes(Hp, Wp, x.dtype))
    fits_single_plane = pair_bytes <= budget_bytes
    lane_sparse = Wp < 128

    if allow_fallback and (lane_sparse or not fits_single_plane):
        # Lane-sparse outputs (Wp < 128) waste most of every vreg/DMA row, and
        # a single plane bigger than the budget has no fitting block yet.
        # TODO(synk): add H-strip tiling for planes that exceed the VMEM budget
        # instead of deferring to XLA's pad.
        return center_padding_ref(x, multiple)

    if not fits_single_plane:
        # Forced Pallas path on an oversized plane: give the compiler headroom.
        vmem_limit = max(vmem_limit, min(2 * pair_bytes + (8 << 20), 128 << 20))

    NC = N * C
    # Largest tile under the byte budget ...
    bc_budget = max(1, budget_bytes // pair_bytes)
    # ... but keep at least ~8 grid steps (or NC, whichever is smaller) so the
    # two v7x TensorCores both get work and input/output DMAs can pipeline.
    target_steps = min(NC, 8)
    bc_cap = max(1, _cdiv(NC, target_steps))
    bc = max(1, min(bc_budget, bc_cap, NC))
    grid = (_cdiv(NC, bc),)

    x2 = x.reshape(NC, H, W)  # free reshape (contiguous)
    itemsize = jnp.dtype(x.dtype).itemsize
    cost = pl.CostEstimate(flops=0, transcendentals=0,
                           bytes_accessed=NC * (H * W + Hp * Wp) * itemsize)

    def kernel(x_ref, o_ref):
        # Dense full-tile zero splat, then one dense interior copy.  The
        # interior double-write is VMEM-store traffic only; HBM DMA is the
        # roofline, and this avoids narrow masked border-strip stores.
        o_ref[...] = jnp.zeros_like(o_ref)
        o_ref[:, pad_top:pad_top + H, pad_lft:pad_lft + W] = x_ref[...]

    out = pl.pallas_call(
        kernel,
        out_shape=jax.ShapeDtypeStruct((NC, Hp, Wp), x.dtype),
        grid=grid,
        in_specs=[pl.BlockSpec((bc, H, W), lambda i: (i, 0, 0))],
        out_specs=pl.BlockSpec((bc, Hp, Wp), lambda i: (i, 0, 0)),
        compiler_params=pltpu.CompilerParams(
            dimension_semantics=("parallel",),
            vmem_limit_bytes=vmem_limit,
        ),
        cost_estimate=cost,
    )(x2)
    return out.reshape(N, C, Hp, Wp)
    # TODO(synk): a standalone pad is HBM-roofline either way; this Pallas
    # kernel pays off when fused with the producer/consumer.


def center_padding_ref(x: jax.Array, multiple: int = 14) -> jax.Array:
    """Pure-JAX reference (mirrors F.pad with centered zero padding on H, W)."""
    N, C, H, W = x.shape
    pad_top, pad_bot = _get_pad(H, multiple)
    pad_lft, pad_rgt = _get_pad(W, multiple)
    return jnp.pad(
        x,
        ((0, 0), (0, 0), (pad_top, pad_bot), (pad_lft, pad_rgt)),
        mode="constant",
        constant_values=0,
    )


if __name__ == "__main__":
    key = jax.random.PRNGKey(0)

    # Small NCHW input consistent with the module (batch=2, channels=4,
    # spatial=16x16); multiple=14 -> padded to 28x28 (6/6 per dim).
    x = jax.random.normal(key, (2, 4, 16, 16), dtype=jnp.float32)
    ref = center_padding_ref(x, multiple=14)

    # Force the Pallas kernel path (the default wrapper would take the jnp.pad
    # fast path for this lane-sparse Wp=28 case).
    out = jax.block_until_ready(center_padding(x, multiple=14, allow_fallback=False))
    assert out.shape == ref.shape, (out.shape, ref.shape)
    assert out.dtype == ref.dtype, (out.dtype, ref.dtype)
    assert jnp.array_equal(out, ref), "Pallas output mismatch vs reference"

    # Default wrapper (fast path) on the same input must also match.
    out_d = jax.block_until_ready(center_padding(x, multiple=14))
    assert jnp.array_equal(out_d, ref)

    # Lane-dense shape (W=130 -> Wp=140 >= 128, H=30 -> Hp=42) goes through the
    # Pallas kernel on the default path.
    x2 = jax.random.normal(key, (2, 4, 30, 130), dtype=jnp.float32)
    out2 = jax.block_until_ready(center_padding(x2, multiple=14))
    assert jnp.array_equal(out2, center_padding_ref(x2, multiple=14))

    # Degenerate no-padding case (H, W already multiples of 14).
    x3 = jax.random.normal(key, (2, 4, 28, 28), dtype=jnp.float32)
    out3 = jax.block_until_ready(center_padding(x3, multiple=14))
    assert jnp.array_equal(out3, center_padding_ref(x3, multiple=14))

    print("KERNEL_OK")
</pallas_src>

<mosaic_0001>
module attributes {stable_mosaic.version = 11 : i64} {
  func.func @kernel(%arg0: i32, %arg1: memref<1x16x16xf32, #tpu.memory_space<vmem>>, %arg2: memref<1x28x28xf32, #tpu.memory_space<vmem>>) attributes {dimension_semantics = [#tpu.dimension_semantics<parallel>], iteration_bounds = array<i64: 8>, scalar_prefetch = 0 : i64, scratch_operands = 0 : i64, tpu.core_type = #tpu.core_type<tc>, window_params = [{transform_indices = @transform_0, window_bounds = array<i64: 1, 16, 16>}, {transform_indices = @transform_1, window_bounds = array<i64: 1, 28, 28>}]} {
    %cst = arith.constant 0.000000e+00 : f32
    %0 = vector.broadcast %cst : f32 to vector<1x28x28xf32>
    %c0 = arith.constant 0 : index
    %c0_0 = arith.constant 0 : index
    %c0_1 = arith.constant 0 : index
    %1 = vector.load %arg2[%c0, %c0_0, %c0_1] : memref<1x28x28xf32, #tpu.memory_space<vmem>>, vector<1x28x28xf32>
    tpu.vector_store %arg2[%c0, %c0_0, %c0_1], %0 {strides = array<i32>} : memref<1x28x28xf32, #tpu.memory_space<vmem>>, vector<1x28x28xf32>,
    %c0_2 = arith.constant 0 : index
    %c0_3 = arith.constant 0 : index
    %c0_4 = arith.constant 0 : index
    %2 = vector.load %arg1[%c0_2, %c0_3, %c0_4] : memref<1x16x16xf32, #tpu.memory_space<vmem>>, vector<1x16x16xf32>
    %c0_5 = arith.constant 0 : index
    %c6 = arith.constant 6 : index
    %c6_6 = arith.constant 6 : index
    %3 = vector.load %arg2[%c0_5, %c6, %c6_6] : memref<1x28x28xf32, #tpu.memory_space<vmem>>, vector<1x16x16xf32>
    tpu.vector_store %arg2[%c0_5, %c6, %c6_6], %2 {strides = array<i32>} : memref<1x28x28xf32, #tpu.memory_space<vmem>>, vector<1x16x16xf32>,
    return
  }
  func.func @transform_0(%arg0: i32) -> (i32, i32, i32) {
    %c0_i32 = arith.constant 0 : i32
    %c0_i32_0 = arith.constant 0 : i32
    %c0_i32_1 = arith.constant 0 : i32
    return %arg0, %c0_i32, %c0_i32_0 : i32, i32, i32
  }
  func.func @transform_1(%arg0: i32) -> (i32, i32, i32) {
    %c0_i32 = arith.constant 0 : i32
    %c0_i32_0 = arith.constant 0 : i32
    %c0_i32_1 = arith.constant 0 : i32
    return %arg0, %c0_i32, %c0_i32_0 : i32, i32, i32
  }
}

</mosaic_0001>

<llo_original>
// kernel: tpu_custom_call.1
$region0: #{tpu_custom_call.1}
  #allocation0 [shape = 'u32[]', space=smem, size = 0x4, offset = 0x4, fixed_abs, tag = 'smem constant byte address 0x4 - core index']
  #allocation1 [shape = 'u32[144,128]{1,0:T(1,128)}', space=vmem, size = 0x12000, scoped, tag = 'internal scratch']
  %s0 = inlined_call_operand.hbm [shape: f32[8,16,16], index: 0, kind: input, shape index: {}]
  %s1 = inlined_call_operand.vmem [shape: f32[8,28,28], index: 1, kind: output, shape index: {}]
  %s2 = sld [smem:[#allocation0]]
  $region41: #{tpu_custom_call.1} parent=0
    _
  %s4 = ssub.s32 1, %s2
  %s5 = scalar_select 0, %s4, %s2
  $region1: #{tpu_custom_call.1} parent=0
    #allocation2 [shape = 'u8[16384]{0}', space=vmem, size = 0x4000, scoped, tag = 'input window, operand 0']
    #allocation3 [shape = 's32[2]{0}', space=sflag, size = 0x8, scoped, tag = 'scoped memory for tpu_custom_call.1']
    %6 = vsyncpa [#allocation3], 0
    %s7 = scalar_lea.sflag [#allocation3], 1
    %8 = vsyncpa %s7, 0
    loop: start=0, step=1, limit=10
    $region2: #{tpu_custom_call.1} parent=1 // loop_pre_header
      _
    $region3: #{tpu_custom_call.1} parent=1 // loop_header
      %s10 = sphi 0, %s14
      %p11 = scmp.ge.s32.totalorder %s10, 10
      %s20 = sphi 0, %s22
      %s23 = sphi 0, %s20
      %s24 = sphi 0, %s23
      %s40 = sphi 0, %s24
      %s46 = sphi 0, %s48
      %s49 = sphi 0, %s46
      %s50 = sphi 0, %s49
      %s66 = sphi 0, %s50
    $region4: #{tpu_custom_call.1} parent=1 // loop_header_branch
      %13 = sbr.rel (%p11) target = $region8
    $region5: #{tpu_custom_call.1} parent=1 // loop_body
      %s15 = ssub.s32 %s10, 1
      %s16 = ssub.s32 %s10, 2
      %s17 = sadd.s32 %s10, 1
      %s18 = ssub.s32 %s10, %s17
      %p19 = scmp.eq.s32.totalorder %s18, 0
      %s21 = sadd.s32 %s20, 1
      %s22 = scalar_select %p19, %s20, %s21
      %p25 = pneg %p19
      %p26 = scmp.eq.s32.totalorder %s10, 7
      %p27 = por %p25, %p26
      %p28 = scmp.ne.s32.totalorder %s20, %s23
      %p29 = scmp.eq.s32.totalorder %s10, 0
      %p30 = por %p28, %p29
      %p31 = scmp.ne.s32.totalorder %s20, %s23
      %p32 = scmp.eq.s32.totalorder %s15, 7
      %p33 = por %p31, %p32
      %p34 = scmp.ne.s32.totalorder %s23, %s24
      %p35 = scmp.eq.s32.totalorder %s15, 0
      %p36 = por %p34, %p35
      %p37 = scmp.ne.s32.totalorder %s23, %s24
      %p38 = scmp.eq.s32.totalorder %s16, 7
      %p39 = por %p37, %p38
      %p41 = scmp.ne.s32.totalorder %s24, %s40
      %p42 = scmp.eq.s32.totalorder %s16, 0
      %p43 = por %p41, %p42
      %s44 = ssub.s32 %s10, %s17
      %p45 = scmp.eq.s32.totalorder %s44, 0
      %s47 = sadd.s32 %s46, 1
      %s48 = scalar_select %p45, %s46, %s47
      %p51 = pneg %p45
      %p52 = scmp.eq.s32.totalorder %s10, 7
      %p53 = por %p51, %p52
      %p54 = scmp.ne.s32.totalorder %s46, %s49
      %p55 = scmp.eq.s32.totalorder %s10, 0
      %p56 = por %p54, %p55
      %p57 = scmp.ne.s32.totalorder %s46, %s49
      %p58 = scmp.eq.s32.totalorder %s15, 7
      %p59 = por %p57, %p58
      %p60 = scmp.ne.s32.totalorder %s49, %s50
      %p61 = scmp.eq.s32.totalorder %s15, 0
      %p62 = por %p60, %p61
      %p63 = scmp.ne.s32.totalorder %s49, %s50
      %p64 = scmp.eq.s32.totalorder %s16, 7
      %p65 = por %p63, %p64
      %p67 = scmp.ne.s32.totalorder %s50, %s66
      %p68 = scmp.eq.s32.totalorder %s16, 0
      %p69 = por %p67, %p68
      %p70 = scmp.le.s32.totalorder 1, %s10
      %p71 = scmp.lt.s32.totalorder %s10, 9
      %p72 = pnand %p70, %p71
      %p73 = pneg %p72
      // Predicated region
      $region9: #{tpu_custom_call.1} parent=5 // pred_check
        _
      $region10: #{tpu_custom_call.1} parent=5 // pred_check_branch
        %75 = sbr.rel (%p72) target = $region12
      $region11: #{tpu_custom_call.1} parent=5 // pred_region
        %s76 = ssub.s32 %s10, 1
      $region12: #{tpu_custom_call.1} parent=5 // pred_fallthru
        _
      %p77 = scmp.lt.s32.totalorder %s10, 8
      // Predicated region
      $region13: #{tpu_custom_call.1} parent=5 // pred_check
        %p78 = pneg %p77
      $region14: #{tpu_custom_call.1} parent=5 // pred_check_branch
        %80 = sbr.rel (%p78) target = $region16
      $region15: #{tpu_custom_call.1} parent=5 // pred_region
        // Predicated region
        $region17: #{tpu_custom_call.1} parent=15 // pred_check
          %p81 = pneg %p30
        $region18: #{tpu_custom_call.1} parent=15 // pred_check_branch
          %83 = sbr.rel (%p81) target = $region20
        $region19: #{tpu_custom_call.1} parent=15 // pred_region
          %s84 = sand.u32 %s20, 1
          %s85 = scalar_lea.sflag [#allocation3], %s84
          %s86 = sand.u32 %s20, 1
          %s87 = smul.addr %s86, 16
          %s88 = scalar_lea.vmem [#allocation2], %s87
          %s90 = ssub.s32 256, 256
          %91 = vsyncadd %s85, %s90
          %s92 = smul.addr %s10, 2
          %s93 = smul.addr %s92, 128
          %s94 = scalar_lea.hbm %s0, %s93
          %s95 = sshll.u32 %s88, 4
          %s96 = int_to_ptr.vmem [resolvable:$true] %s95
          %101 = dma.hbm_to_vmem [thread:$0]  %s94, 256, %s96, %s85, 128, 128, 8
        $region20: #{tpu_custom_call.1} parent=15 // pred_fallthru
          _
      $region16: #{tpu_custom_call.1} parent=5 // pred_fallthru
        _
      %p102 = scmp.le.s32.totalorder 1, %s10
      %p103 = scmp.lt.s32.totalorder %s10, 9
      %p104 = pnand %p102, %p103
      %p105 = pneg %p104
      // Predicated region
      $region21: #{tpu_custom_call.1} parent=5 // pred_check
        _
      $region22: #{tpu_custom_call.1} parent=5 // pred_check_branch
        %107 = sbr.rel (%p104) target = $region24
      $region23: #{tpu_custom_call.1} parent=5 // pred_region
        %s108 = ssub.s32 %s10, 1
        %s109 = sand.u32 %s23, 1
        %s110 = scalar_lea.sflag [#allocation3], %s109
        %s111 = sand.u32 %s23, 1
        %s112 = smul.addr %s111, 16
        %s113 = scalar_lea.vmem [#allocation2], %s112
        // Predicated region
        $region25: #{tpu_custom_call.1} parent=23 // pred_check
          %p114 = pneg %p36
        $region26: #{tpu_custom_call.1} parent=23 // pred_check_branch
          %116 = sbr.rel (%p114) target = $region28
        $region27: #{tpu_custom_call.1} parent=23 // pred_region
          %117 = dma.done %s110, 256
        $region28: #{tpu_custom_call.1} parent=23 // pred_fallthru
          _
        %s118 = sand.u32 %s23, 1
        %s119 = scalar_lea.sflag [#allocation3], %s118
        %s120 = sand.u32 %s23, 1
        %s121 = smul.addr %s120, 16
        %s122 = scalar_lea.vmem [#allocation2], %s121
        %p123 = pneg %p36
        %p124 = pneg %p33
        %p125 = pneg %p62
        %p126 = pneg %p59
        %p127 = scmp.lt.s32.totalorder %s15, 7
        %s128 = scalar_select %p127, %s15, 7
        %s129 = smul.addr %s128, 4
        %s130 = smul.addr %s129, 8
        %s131 = scalar_lea.vmem %s1, %s130
        %p132 = scmp.lt.s32.totalorder %s15, 7
        %s133 = scalar_select %p132, %s15, 7
        %s134 = smul.addr %s133, 4
        %s135 = smul.addr %s134, 8
        %s136 = scalar_lea.vmem %s1, %s135
        %vm137 = vcmask 228352
        %138 = vst.msk [vmem:[%s136] sm:$0xff] %vm137, 0.0
        %139 = vst.msk [vmem:[%s136 + $0x8] sm:$0xff] %vm137, 0.0
        %140 = vst.msk [vmem:[%s136 + $0x10] sm:$0xff] %vm137, 0.0
        %vm141 = vcmask 224256
        %142 = vst.msk [vmem:[%s136 + $0x18] sm:$0xf] %vm141, 0.0
        %v143 = vld [vmem:[%s113] sm:$0xff]
        %v144 = vld [vmem:[%s113 + $0x8] sm:$0xff]
        %147 = vrot.lane.b32.xlu0 %v143, 6
        %v148 = vpop.permute.xlu0 %147
        %149 = vrot.lane.b32.xlu0 %v144, 6
        %v150 = vpop.permute.xlu0 %149
        %vm153 = vcmask 179248
        %154 = vst.msk [vmem:[%s136 + $0x6] sm:$0xff] %vm153, %v148
        %155 = vst.msk [vmem:[%s136 + $0xe] sm:$0xff] %vm153, %v150
        %p156 = scmp.lt.s32.totalorder %s15, 7
        %s157 = scalar_select %p156, %s15, 7
        %s158 = smul.addr %s157, 4
        %s159 = smul.addr %s158, 8
        %s160 = scalar_lea.vmem %s1, %s159
        // Predicated region
        $region29: #{tpu_custom_call.1} parent=23 // pred_check
          %p161 = pneg %p59
        $region30: #{tpu_custom_call.1} parent=23 // pred_check_branch
          %163 = sbr.rel (%p161) target = $region32
        $region31: #{tpu_custom_call.1} parent=23 // pred_region
          _
        $region32: #{tpu_custom_call.1} parent=23 // pred_fallthru
          _
      $region24: #{tpu_custom_call.1} parent=5 // pred_fallthru
        _
      %p164 = scmp.le.s32.totalorder 2, %s10
      // Predicated region
      $region33: #{tpu_custom_call.1} parent=5 // pred_check
        %p165 = pneg %p164
      $region34: #{tpu_custom_call.1} parent=5 // pred_check_branch
        %167 = sbr.rel (%p165) target = $region36
      $region35: #{tpu_custom_call.1} parent=5 // pred_region
        %s168 = ssub.s32 %s10, 2
        // Predicated region
        $region37: #{tpu_custom_call.1} parent=35 // pred_check
          %p169 = pneg %p65
        $region38: #{tpu_custom_call.1} parent=35 // pred_check_branch
          %171 = sbr.rel (%p169) target = $region40
        $region39: #{tpu_custom_call.1} parent=35 // pred_region
          %p172 = scmp.lt.s32.totalorder %s16, 7
          %s173 = scalar_select %p172, %s16, 7
          %s174 = smul.addr %s173, 4
          %s175 = smul.addr %s174, 8
          %s176 = scalar_lea.vmem %s1, %s175
        $region40: #{tpu_custom_call.1} parent=35 // pred_fallthru
          _
      $region36: #{tpu_custom_call.1} parent=5 // pred_fallthru
        _
    $region6: #{tpu_custom_call.1} parent=1 // loop_footer
      %s14 = sadd.s32 1, %s10
    $region7: #{tpu_custom_call.1} parent=1 // loop_footer_branch
      %9 = sbr.rel target = $region3
    $region8: #{tpu_custom_call.1} parent=1 // loop_exit
      _
    %177 = vsyncpa [#allocation3], 1
    %s178 = scalar_lea.sflag [#allocation3], 1
    %179 = vsyncpa %s178, 1

</llo_original>
